<compile_context>
chip_gen: v7x
topology: tpu7x:2x2x1
jax: 0.10.0
libtpu: 0.0.40
codegen_flags: <defaults>
</compile_context>

<pallas_src>
import math

import jax
import jax.numpy as jnp
from jax.experimental import pallas as pl
from jax.experimental.pallas import tpu as pltpu


# ----------------------------------------------------------------------------
# Hidden-dim computation, mirrors the PyTorch constructor exactly.
# ----------------------------------------------------------------------------
def compute_hidden_dim(dim, hidden_dim, multiple_of, ffn_dim_multiplier=None):
    hidden_dim = int(2 * hidden_dim / 3)
    if ffn_dim_multiplier:
        hidden_dim = int(ffn_dim_multiplier * hidden_dim)
    hidden_dim = multiple_of * ((hidden_dim + multiple_of - 1) // multiple_of)
    return hidden_dim


def _vmem_capacity_bytes():
    try:
        return int(pltpu.get_tpu_info().vmem_capacity_bytes)
    except Exception:
        return 64 << 20  # conservative default (v7x per-TC VMEM)


def _pick_block_h(H, D, vmem_cap):
    """Largest hidden tile (<=512) dividing H, MXU-aligned, within a weight budget."""
    budget = int(vmem_cap * 0.4)              # weight-tile share of VMEM
    for align in (256, 128):                  # 256 fills the v6e/v7x MXU; 128 ok on v5e
        th = (min(512, H) // align) * align
        while th >= align:
            if H % th == 0:
                wbytes = 2 * D * (2 * th) * 2 + 2 * th * D * 2   # dbl-buffered bf16
                if wbytes <= budget:
                    return th
            th -= align
    return H                                  # fall back to full extent


def _pick_block_m(M, D, th, out_itemsize, vmem_cap):
    """Largest row tile fitting VMEM, multiple of 8, >=2 row tiles when possible (v7x)."""
    budget = int(vmem_cap * 0.6)
    weight_bytes = 2 * D * (2 * th) * 2 + 2 * th * D * 2
    per_row = 2 * D * 2 + D * 4 + 2 * D * out_itemsize    # x dbl-buf + f32 acc + out dbl-buf
    tm_max = max(8, max(budget - weight_bytes, 0) // max(per_row, 1))
    tm_max = max(8, min(1024, (tm_max // 8) * 8))
    if M >= 16:                               # keep >=2 programs on the parallel axis
        tm_max = min(tm_max, max(8, ((M // 2) // 8) * 8))
    cand = min(tm_max, (M // 8) * 8)
    while cand >= 8:
        if M % cand == 0:
            return cand
        cand -= 8
    return M                                  # fall back to full extent (1 row tile)


# ----------------------------------------------------------------------------
# One-time parameter prep (hoisted out of the forward path).
#   w1, w3: (D, H)   w2: (H, D)   (pre-transposed: in_dim x out_dim)
# Produces per-hidden-tile contiguous, bf16-cast, fused weights:
#   w13: (nh, D, 2*th) with columns [w1_j | w3_j]     w2: (nh, th, D)
# ----------------------------------------------------------------------------
def prepare_ffn_params(w1, w2, w3, *, block_h=None, param_dtype=jnp.bfloat16):
    D, H = w1.shape
    assert w3.shape == (D, H) and w2.shape == (H, D)
    vmem_cap = _vmem_capacity_bytes()
    th = _pick_block_h(H, D, vmem_cap) if block_h is None else block_h
    assert H % th == 0, "hidden dim must divide evenly by block_h"
    assert th % 128 == 0 or th == H, "block_h must be lane-aligned (multiple of 128)"
    nh = H // th
    w13 = jnp.concatenate([w1.reshape(D, nh, th), w3.reshape(D, nh, th)], axis=-1)
    w13 = jnp.transpose(w13, (1, 0, 2)).astype(param_dtype)       # (nh, D, 2*th)
    w2b = w2.reshape(nh, th, D).astype(param_dtype)               # (nh, th, D)
    return {"w13": w13, "w2": w2b, "dim": D, "hidden": H, "block_h": th}


# ----------------------------------------------------------------------------
# Pallas kernel: one (row-tile, hidden-tile) step of the SwiGLU FFN.
#   x_ref   : (tm, D)      bf16   token rows
#   w13_ref : (D, 2*th)    bf16   [w1_j | w3_j] fused up-projection tile
#   w2_ref  : (th, D)      bf16   down-projection tile
#   o_ref   : (tm, D)      out    output rows (same block across the j axis)
#   acc_ref : (tm, D)      f32    VMEM accumulator scratch
# ----------------------------------------------------------------------------
def _ffn_kernel(x_ref, w13_ref, w2_ref, o_ref, acc_ref):
    j = pl.program_id(1)

    @pl.when(j == 0)
    def _init():
        acc_ref[...] = jnp.zeros_like(acc_ref)

    th = w2_ref.shape[0]                              # static hidden-tile width

    # Fused up-projection: one wide MXU matmul, f32 accumulation.
    h13 = jnp.dot(x_ref[...], w13_ref[...],
                  preferred_element_type=jnp.float32)             # (tm, 2*th) f32
    h1 = h13[:, :th]                                  # lane-aligned split (th % 128 == 0)
    h3 = h13[:, th:]

    # SwiGLU gating in f32: silu(h1) * h3  (sigmoid -> EUP, multiplies -> VPU).
    gate = (h1 * jax.nn.sigmoid(h1)) * h3

    # Down-projection for this hidden tile, accumulated in f32.
    acc_ref[...] += jnp.dot(gate.astype(w2_ref.dtype), w2_ref[...],
                            preferred_element_type=jnp.float32)

    @pl.when(j == pl.num_programs(1) - 1)
    def _finalize():
        o_ref[...] = acc_ref[...].astype(o_ref.dtype)


# ----------------------------------------------------------------------------
# Forward wrapper: tiling + pallas_call.  Weight prep is NOT done here.
#   x : (..., D)   params: output of prepare_ffn_params
# ----------------------------------------------------------------------------
def feedforward_forward(x, params, *, block_m=None, out_dtype=None):
    *lead, D = x.shape
    assert D == params["dim"]
    M = 1
    for s in lead:
        M *= s
    H = params["hidden"]
    th = params["block_h"]
    nh = H // th

    out_dtype = x.dtype if out_dtype is None else out_dtype
    out_itemsize = jnp.dtype(out_dtype).itemsize

    vmem_cap = _vmem_capacity_bytes()
    tm = _pick_block_m(M, D, th, out_itemsize, vmem_cap) if block_m is None else block_m
    assert M % tm == 0, "row count must divide evenly by block_m"
    assert tm % 8 == 0 or tm == M, "block_m must be sublane-aligned (multiple of 8)"

    x_m = x.reshape(M, D).astype(jnp.bfloat16)

    # VMEM budget for this config (double-buffered inputs/outputs + f32 scratch).
    footprint = (2 * D * (2 * th) * 2 + 2 * th * D * 2     # weight tiles
                 + 2 * tm * D * 2                           # x tiles
                 + tm * D * 4                               # f32 accumulator
                 + 2 * tm * D * out_itemsize)               # out tiles
    vmem_limit = min(vmem_cap, max(32 << 20, int(footprint * 1.5) + (4 << 20)))

    out = pl.pallas_call(
        _ffn_kernel,
        out_shape=jax.ShapeDtypeStruct((M, D), out_dtype),
        grid_spec=pltpu.PrefetchScalarGridSpec(
            num_scalar_prefetch=0,
            grid=(M // tm, nh),                              # rows (parallel), hidden (reduce)
            in_specs=[
                pl.BlockSpec((tm, D), lambda i, j: (i, 0)),             # x rows
                pl.BlockSpec((None, D, 2 * th), lambda i, j: (j, 0, 0)),  # fused w1/w3 tile
                pl.BlockSpec((None, th, D), lambda i, j: (j, 0, 0)),      # w2 tile
            ],
            out_specs=pl.BlockSpec((tm, D), lambda i, j: (i, 0)),
            scratch_shapes=[pltpu.VMEM((tm, D), jnp.float32)],
        ),
        compiler_params=pltpu.CompilerParams(
            dimension_semantics=("parallel", "arbitrary"),
            vmem_limit_bytes=vmem_limit),
    )(x_m, params["w13"], params["w2"])

    return out.reshape(*lead, D)


# ----------------------------------------------------------------------------
# Pure-JAX f32 reference (mirrors the PyTorch forward exactly).
# ----------------------------------------------------------------------------
def feedforward_reference(x, w1, w2, w3):
    h1 = x @ w1
    h3 = x @ w3
    return (h1 * jax.nn.sigmoid(h1) * h3) @ w2


# ----------------------------------------------------------------------------
if __name__ == "__main__":
    B, S, dim = 2, 8, 64
    multiple_of = 128
    hidden_arg = 4 * dim
    H = compute_hidden_dim(dim, hidden_arg, multiple_of)     # -> 256

    key = jax.random.PRNGKey(0)
    kx, k1, k2, k3 = jax.random.split(key, 4)

    x = jax.random.normal(kx, (B, S, dim), dtype=jnp.float32)
    # Weights stored pre-transposed (in_dim x out_dim), fan-in scaled.
    w1 = jax.random.normal(k1, (dim, H), dtype=jnp.float32) / math.sqrt(dim)
    w3 = jax.random.normal(k3, (dim, H), dtype=jnp.float32) / math.sqrt(dim)
    w2 = jax.random.normal(k2, (H, dim), dtype=jnp.float32) / math.sqrt(H)

    # One-time weight fusion / cast (hoisted out of the forward path).
    # block_h=128 -> two hidden tiles, exercises the accumulator/reduction path.
    params = prepare_ffn_params(w1, w2, w3, block_h=128)

    # block_m auto-picks 8 -> two row tiles (parallel axis has >=2 programs).
    out = feedforward_forward(x, params)
    out = jax.block_until_ready(out)

    ref = feedforward_reference(x, w1, w2, w3)
    assert out.shape == (B, S, dim)
    out_f32 = out.astype(jnp.float32)
    max_err = jnp.max(jnp.abs(out_f32 - ref))
    # bf16 MXU operands -> ~1e-2 level absolute error vs. the f32 reference.
    assert jnp.allclose(out_f32, ref, atol=5e-2, rtol=5e-2), \
        f"max abs err = {max_err}"

    print("KERNEL_OK")
</pallas_src>

<mosaic_0001>
module attributes {stable_mosaic.version = 11 : i64} {
  func.func @_ffn_kernel(%arg0: i32, %arg1: i32, %arg2: memref<8x64xbf16, #tpu.memory_space<vmem>>, %arg3: memref<1x64x256xbf16, #tpu.memory_space<vmem>>, %arg4: memref<1x128x64xbf16, #tpu.memory_space<vmem>>, %arg5: memref<8x64xf32, #tpu.memory_space<vmem>>, %arg6: memref<8x64xf32, #tpu.memory_space<vmem>>) attributes {dimension_semantics = [#tpu.dimension_semantics<parallel>, #tpu.dimension_semantics<arbitrary>], iteration_bounds = array<i64: 2, 2>, scalar_prefetch = 0 : i64, scratch_operands = 1 : i64, tpu.core_type = #tpu.core_type<tc>, window_params = [{transform_indices = @transform_0, window_bounds = array<i64: 8, 64>}, {transform_indices = @transform_1, window_bounds = array<i64: 1, 64, 256>}, {transform_indices = @transform_2, window_bounds = array<i64: 1, 128, 64>}, {transform_indices = @transform_3, window_bounds = array<i64: 8, 64>}]} {
    %c0_i32 = arith.constant 0 : i32
    %0 = arith.cmpi eq, %arg1, %c0_i32 : i32
    %1 = arith.extui %0 : i1 to i32
    %c0_i32_0 = arith.constant 0 : i32
    %2 = arith.cmpi ne, %1, %c0_i32_0 : i32
    scf.if %2 {
      %cst_15 = arith.constant 0.000000e+00 : f32
      %26 = vector.broadcast %cst_15 : f32 to vector<8x64xf32>
      %c0_16 = arith.constant 0 : index
      %c0_17 = arith.constant 0 : index
      %27 = vector.load %arg6[%c0_16, %c0_17] : memref<8x64xf32, #tpu.memory_space<vmem>>, vector<8x64xf32>
      tpu.vector_store %arg6[%c0_16, %c0_17], %26 {strides = array<i32>} : memref<8x64xf32, #tpu.memory_space<vmem>>, vector<8x64xf32>,
    } else {
    }
    %c0 = arith.constant 0 : index
    %c0_1 = arith.constant 0 : index
    %3 = vector.load %arg2[%c0, %c0_1] : memref<8x64xbf16, #tpu.memory_space<vmem>>, vector<8x64xbf16>
    %c0_2 = arith.constant 0 : index
    %c0_3 = arith.constant 0 : index
    %c0_4 = arith.constant 0 : index
    %4 = vector.load %arg3[%c0_2, %c0_3, %c0_4] : memref<1x64x256xbf16, #tpu.memory_space<vmem>>, vector<1x64x256xbf16>
    %5 = vector.shape_cast %4 : vector<1x64x256xbf16> to vector<64x256xbf16>
    %cst = arith.constant dense<0.000000e+00> : vector<8x256xf32>
    %6 = tpu.matmul %3, %5, %cst {dimension_numbers = #tpu.dot_dimension_numbers<[1], [0], [0], [1], [0, 0, 1, 1], [], []>} : vector<8x64xbf16>, vector<64x256xbf16>, vector<8x256xf32> -> vector<8x256xf32>
    %7 = vector.extract_strided_slice %6 {offsets = [0, 0], sizes = [8, 128], strides = [1, 1]} : vector<8x256xf32> to vector<8x128xf32>
    %8 = vector.extract_strided_slice %6 {offsets = [0, 128], sizes = [8, 128], strides = [1, 1]} : vector<8x256xf32> to vector<8x128xf32>
    %9 = arith.negf %7 : vector<8x128xf32>
    %10 = math.exp %9 : vector<8x128xf32>
    %cst_5 = arith.constant 1.000000e+00 : f32
    %11 = vector.broadcast %cst_5 : f32 to vector<8x128xf32>
    %12 = arith.addf %11, %10 : vector<8x128xf32>
    %13 = arith.divf %11, %12 : vector<8x128xf32>
    %14 = arith.mulf %7, %13 : vector<8x128xf32>
    %15 = arith.mulf %14, %8 : vector<8x128xf32>
    %c0_6 = arith.constant 0 : index
    %c0_7 = arith.constant 0 : index
    %16 = vector.load %arg6[%c0_6, %c0_7] : memref<8x64xf32, #tpu.memory_space<vmem>>, vector<8x64xf32>
    %17 = arith.truncf %15 : vector<8x128xf32> to vector<8x128xbf16>
    %c0_8 = arith.constant 0 : index
    %c0_9 = arith.constant 0 : index
    %c0_10 = arith.constant 0 : index
    %18 = vector.load %arg4[%c0_8, %c0_9, %c0_10] : memref<1x128x64xbf16, #tpu.memory_space<vmem>>, vector<1x128x64xbf16>
    %19 = vector.shape_cast %18 : vector<1x128x64xbf16> to vector<128x64xbf16>
    %cst_11 = arith.constant dense<0.000000e+00> : vector<8x64xf32>
    %20 = tpu.matmul %17, %19, %cst_11 {dimension_numbers = #tpu.dot_dimension_numbers<[1], [0], [0], [1], [0, 0, 1, 1], [], []>} : vector<8x128xbf16>, vector<128x64xbf16>, vector<8x64xf32> -> vector<8x64xf32>
    %21 = arith.addf %16, %20 : vector<8x64xf32>
    %c0_12 = arith.constant 0 : index
    %c0_13 = arith.constant 0 : index
    %22 = vector.load %arg6[%c0_12, %c0_13] : memref<8x64xf32, #tpu.memory_space<vmem>>, vector<8x64xf32>
    tpu.vector_store %arg6[%c0_12, %c0_13], %21 {strides = array<i32>} : memref<8x64xf32, #tpu.memory_space<vmem>>, vector<8x64xf32>,
    %c1_i32 = arith.constant 1 : i32
    %23 = arith.cmpi eq, %arg1, %c1_i32 : i32
    %24 = arith.extui %23 : i1 to i32
    %c0_i32_14 = arith.constant 0 : i32
    %25 = arith.cmpi ne, %24, %c0_i32_14 : i32
    scf.if %25 {
      %c0_15 = arith.constant 0 : index
      %c0_16 = arith.constant 0 : index
      %26 = vector.load %arg6[%c0_15, %c0_16] : memref<8x64xf32, #tpu.memory_space<vmem>>, vector<8x64xf32>
      %c0_17 = arith.constant 0 : index
      %c0_18 = arith.constant 0 : index
      %27 = vector.load %arg5[%c0_17, %c0_18] : memref<8x64xf32, #tpu.memory_space<vmem>>, vector<8x64xf32>
      tpu.vector_store %arg5[%c0_17, %c0_18], %26 {strides = array<i32>} : memref<8x64xf32, #tpu.memory_space<vmem>>, vector<8x64xf32>,
    } else {
    }
    return
  }
  func.func @transform_0(%arg0: i32, %arg1: i32) -> (i32, i32) {
    %c0_i32 = arith.constant 0 : i32
    %c0_i32_0 = arith.constant 0 : i32
    return %arg0, %c0_i32 : i32, i32
  }
  func.func @transform_1(%arg0: i32, %arg1: i32) -> (i32, i32, i32) {
    %c0_i32 = arith.constant 0 : i32
    %c0_i32_0 = arith.constant 0 : i32
    %c0_i32_1 = arith.constant 0 : i32
    return %arg1, %c0_i32, %c0_i32_0 : i32, i32, i32
  }
  func.func @transform_2(%arg0: i32, %arg1: i32) -> (i32, i32, i32) {
    %c0_i32 = arith.constant 0 : i32
    %c0_i32_0 = arith.constant 0 : i32
    %c0_i32_1 = arith.constant 0 : i32
    return %arg1, %c0_i32, %c0_i32_0 : i32, i32, i32
  }
  func.func @transform_3(%arg0: i32, %arg1: i32) -> (i32, i32) {
    %c0_i32 = arith.constant 0 : i32
    %c0_i32_0 = arith.constant 0 : i32
    return %arg0, %c0_i32 : i32, i32
  }
}

</mosaic_0001>

<llo_original>
// kernel: tpu_custom_call.1
$region0: #{tpu_custom_call.1}
  #allocation0 [shape = 'u32[]', space=smem, size = 0x4, offset = 0x4, fixed_abs, tag = 'smem constant byte address 0x4 - core index']
  #allocation1 [shape = 'u32[144,128]{1,0:T(1,128)}', space=vmem, size = 0x12000, scoped, tag = 'internal scratch']
  #allocation2 [shape = 'f32[8,64]{1,0:T(8,128)}', space=vmem, size = 0x1000, scoped, tag = 'scratch operand']
  %s0 = inlined_call_operand.vmem [shape: bf16[16,64], index: 0, kind: input, shape index: {}]
  %s1 = inlined_call_operand.vmem [shape: bf16[2,64,256], index: 1, kind: input, shape index: {}]
  %s2 = inlined_call_operand.vmem [shape: bf16[2,128,64], index: 2, kind: input, shape index: {}]
  %s3 = inlined_call_operand.hbm [shape: f32[16,64], index: 3, kind: output, shape index: {}]
  %s4 = sld [smem:[#allocation0]]
  $region53: #{tpu_custom_call.1} parent=0
    _
  %s6 = ssub.s32 1, %s4
  %s7 = scalar_select 0, %s6, %s4
  $region1: #{tpu_custom_call.1} parent=0
    #allocation3 [shape = 'u8[8192]{0}', space=vmem, size = 0x2000, scoped, tag = 'output window, operand 0']
    #allocation4 [shape = 's32[2]{0}', space=sflag, size = 0x8, scoped, tag = 'scoped memory for tpu_custom_call.1']
    %8 = vsyncpa [#allocation4], 0
    %s9 = scalar_lea.sflag [#allocation4], 1
    %10 = vsyncpa %s9, 0
    loop: start=0, step=1, limit=6
    $region2: #{tpu_custom_call.1} parent=1 // loop_pre_header
      _
    $region3: #{tpu_custom_call.1} parent=1 // loop_header
      %s12 = sphi 0, %s16
      %p13 = scmp.ge.s32.totalorder %s12, 6
      %s19 = sphi 0, %s31
      %s20 = sphi 0, %s27
      %s21 = sphi 0, %s19
      %s22 = sphi 0, %s20
      %s23 = sphi 0, %s21
      %s24 = sphi 0, %s22
      %s34 = sphi 0, %s36
      %s37 = sphi 0, %s34
      %s38 = sphi 0, %s37
      %s54 = sphi 0, %s38
      %s60 = sphi 0, %s62
      %s63 = sphi 0, %s60
      %s64 = sphi 0, %s63
      %s80 = sphi 0, %s64
      %s86 = sphi 0, %s88
      %s89 = sphi 0, %s86
      %s90 = sphi 0, %s89
      %s106 = sphi 0, %s90
      %s112 = sphi 0, %s114
      %s115 = sphi 0, %s112
      %s116 = sphi 0, %s115
      %s132 = sphi 0, %s116
    $region4: #{tpu_custom_call.1} parent=1 // loop_header_branch
      %15 = sbr.rel (%p13) target = $region8
    $region5: #{tpu_custom_call.1} parent=1 // loop_body
      %s17 = ssub.s32 %s12, 1
      %s18 = ssub.s32 %s12, 2
      %s25 = sadd.s32 1, %s20
      %p26 = scmp.ge.s32.totalorder %s25, 2
      %s27 = scalar_select %p26, 0, %s25
      %s28 = sadd.s32 1, %s19
      %s29 = scalar_select %p26, %s28, %s19
      %p30 = scmp.ge.s32.totalorder %s29, 2
      %s31 = scalar_select %p30, 0, %s29
      %s32 = ssub.s32 %s19, %s31
      %p33 = scmp.eq.s32.totalorder %s32, 0
      %s35 = sadd.s32 %s34, 1
      %s36 = scalar_select %p33, %s34, %s35
      %p39 = pneg %p33
      %p40 = scmp.eq.s32.totalorder %s12, 3
      %p41 = por %p39, %p40
      %p42 = scmp.ne.s32.totalorder %s34, %s37
      %p43 = scmp.eq.s32.totalorder %s12, 0
      %p44 = por %p42, %p43
      %p45 = scmp.ne.s32.totalorder %s34, %s37
      %p46 = scmp.eq.s32.totalorder %s17, 3
      %p47 = por %p45, %p46
      %p48 = scmp.ne.s32.totalorder %s37, %s38
      %p49 = scmp.eq.s32.totalorder %s17, 0
      %p50 = por %p48, %p49
      %p51 = scmp.ne.s32.totalorder %s37, %s38
      %p52 = scmp.eq.s32.totalorder %s18, 3
      %p53 = por %p51, %p52
      %p55 = scmp.ne.s32.totalorder %s38, %s54
      %p56 = scmp.eq.s32.totalorder %s18, 0
      %p57 = por %p55, %p56
      %s58 = ssub.s32 %s20, %s27
      %p59 = scmp.eq.s32.totalorder %s58, 0
      %s61 = sadd.s32 %s60, 1
      %s62 = scalar_select %p59, %s60, %s61
      %p65 = pneg %p59
      %p66 = scmp.eq.s32.totalorder %s12, 3
      %p67 = por %p65, %p66
      %p68 = scmp.ne.s32.totalorder %s60, %s63
      %p69 = scmp.eq.s32.totalorder %s12, 0
      %p70 = por %p68, %p69
      %p71 = scmp.ne.s32.totalorder %s60, %s63
      %p72 = scmp.eq.s32.totalorder %s17, 3
      %p73 = por %p71, %p72
      %p74 = scmp.ne.s32.totalorder %s63, %s64
      %p75 = scmp.eq.s32.totalorder %s17, 0
      %p76 = por %p74, %p75
      %p77 = scmp.ne.s32.totalorder %s63, %s64
      %p78 = scmp.eq.s32.totalorder %s18, 3
      %p79 = por %p77, %p78
      %p81 = scmp.ne.s32.totalorder %s64, %s80
      %p82 = scmp.eq.s32.totalorder %s18, 0
      %p83 = por %p81, %p82
      %s84 = ssub.s32 %s20, %s27
      %p85 = scmp.eq.s32.totalorder %s84, 0
      %s87 = sadd.s32 %s86, 1
      %s88 = scalar_select %p85, %s86, %s87
      %p91 = pneg %p85
      %p92 = scmp.eq.s32.totalorder %s12, 3
      %p93 = por %p91, %p92
      %p94 = scmp.ne.s32.totalorder %s86, %s89
      %p95 = scmp.eq.s32.totalorder %s12, 0
      %p96 = por %p94, %p95
      %p97 = scmp.ne.s32.totalorder %s86, %s89
      %p98 = scmp.eq.s32.totalorder %s17, 3
      %p99 = por %p97, %p98
      %p100 = scmp.ne.s32.totalorder %s89, %s90
      %p101 = scmp.eq.s32.totalorder %s17, 0
      %p102 = por %p100, %p101
      %p103 = scmp.ne.s32.totalorder %s89, %s90
      %p104 = scmp.eq.s32.totalorder %s18, 3
      %p105 = por %p103, %p104
      %p107 = scmp.ne.s32.totalorder %s90, %s106
      %p108 = scmp.eq.s32.totalorder %s18, 0
      %p109 = por %p107, %p108
      %s110 = ssub.s32 %s19, %s31
      %p111 = scmp.eq.s32.totalorder %s110, 0
      %s113 = sadd.s32 %s112, 1
      %s114 = scalar_select %p111, %s112, %s113
      %p117 = pneg %p111
      %p118 = scmp.eq.s32.totalorder %s12, 3
      %p119 = por %p117, %p118
      %p120 = scmp.ne.s32.totalorder %s112, %s115
      %p121 = scmp.eq.s32.totalorder %s12, 0
      %p122 = por %p120, %p121
      %p123 = scmp.ne.s32.totalorder %s112, %s115
      %p124 = scmp.eq.s32.totalorder %s17, 3
      %p125 = por %p123, %p124
      %p126 = scmp.ne.s32.totalorder %s115, %s116
      %p127 = scmp.eq.s32.totalorder %s17, 0
      %p128 = por %p126, %p127
      %p129 = scmp.ne.s32.totalorder %s115, %s116
      %p130 = scmp.eq.s32.totalorder %s18, 3
      %p131 = por %p129, %p130
      %p133 = scmp.ne.s32.totalorder %s116, %s132
      %p134 = scmp.eq.s32.totalorder %s18, 0
      %p135 = por %p133, %p134
      %p136 = scmp.le.s32.totalorder 1, %s12
      %p137 = scmp.lt.s32.totalorder %s12, 5
      %p138 = pnand %p136, %p137
      %p139 = pneg %p138
      // Predicated region
      $region9: #{tpu_custom_call.1} parent=5 // pred_check
        _
      $region10: #{tpu_custom_call.1} parent=5 // pred_check_branch
        %141 = sbr.rel (%p138) target = $region12
      $region11: #{tpu_custom_call.1} parent=5 // pred_region
        %s142 = ssub.s32 %s12, 1
      $region12: #{tpu_custom_call.1} parent=5 // pred_fallthru
        _
      %p143 = scmp.lt.s32.totalorder %s12, 4
      // Predicated region
      $region13: #{tpu_custom_call.1} parent=5 // pred_check
        %p144 = pneg %p143
      $region14: #{tpu_custom_call.1} parent=5 // pred_check_branch
        %146 = sbr.rel (%p144) target = $region16
      $region15: #{tpu_custom_call.1} parent=5 // pred_region
        // Predicated region
        $region17: #{tpu_custom_call.1} parent=15 // pred_check
          %p147 = pneg %p44
        $region18: #{tpu_custom_call.1} parent=15 // pred_check_branch
          %149 = sbr.rel (%p147) target = $region20
        $region19: #{tpu_custom_call.1} parent=15 // pred_region
          %p150 = scmp.lt.s32.totalorder %s19, 1
          %s151 = scalar_select %p150, %s19, 1
          %s152 = smul.addr %s151, 4
          %s153 = scalar_lea.vmem %s0, %s152
        $region20: #{tpu_custom_call.1} parent=15 // pred_fallthru
          _
        // Predicated region
        $region21: #{tpu_custom_call.1} parent=15 // pred_check
          %p154 = pneg %p70
        $region22: #{tpu_custom_call.1} parent=15 // pred_check_branch
          %156 = sbr.rel (%p154) target = $region24
        $region23: #{tpu_custom_call.1} parent=15 // pred_region
          %p157 = scmp.lt.s32.totalorder %s20, 1
          %s158 = scalar_select %p157, %s20, 1
          %s159 = smul.addr %s158, 16
          %s160 = smul.addr %s159, 4
          %s161 = scalar_lea.vmem %s1, %s160
        $region24: #{tpu_custom_call.1} parent=15 // pred_fallthru
          _
        // Predicated region
        $region25: #{tpu_custom_call.1} parent=15 // pred_check
          %p162 = pneg %p96
        $region26: #{tpu_custom_call.1} parent=15 // pred_check_branch
          %164 = sbr.rel (%p162) target = $region28
        $region27: #{tpu_custom_call.1} parent=15 // pred_region
          %p165 = scmp.lt.s32.totalorder %s20, 1
          %s166 = scalar_select %p165, %s20, 1
          %s167 = smul.addr %s166, 16
          %s168 = smul.addr %s167, 4
          %s169 = scalar_lea.vmem %s2, %s168
        $region28: #{tpu_custom_call.1} parent=15 // pred_fallthru
          _
      $region16: #{tpu_custom_call.1} parent=5 // pred_fallthru
        _
      %p170 = scmp.le.s32.totalorder 1, %s12
      %p171 = scmp.lt.s32.totalorder %s12, 5
      %p172 = pnand %p170, %p171
      %p173 = pneg %p172
      // Predicated region
      $region29: #{tpu_custom_call.1} parent=5 // pred_check
        _
      $region30: #{tpu_custom_call.1} parent=5 // pred_check_branch
        %175 = sbr.rel (%p172) target = $region32
      $region31: #{tpu_custom_call.1} parent=5 // pred_region
        %s176 = ssub.s32 %s12, 1
        %p177 = scmp.lt.s32.totalorder %s21, 1
        %s178 = scalar_select %p177, %s21, 1
        %s179 = smul.addr %s178, 4
        %s180 = scalar_lea.vmem %s0, %s179
        %p181 = pneg %p50
        %p182 = pneg %p47
        %p183 = scmp.lt.s32.totalorder %s22, 1
        %s184 = scalar_select %p183, %s22, 1
        %s185 = smul.addr %s184, 16
        %s186 = smul.addr %s185, 4
        %s187 = scalar_lea.vmem %s1, %s186
        %p188 = pneg %p76
        %p189 = pneg %p73
        %p190 = scmp.lt.s32.totalorder %s22, 1
        %s191 = scalar_select %p190, %s22, 1
        %s192 = smul.addr %s191, 16
        %s193 = smul.addr %s192, 4
        %s194 = scalar_lea.vmem %s2, %s193
        %p195 = pneg %p102
        %p196 = pneg %p99
        %p197 = pneg %p128
        %p198 = pneg %p125
        %s199 = sand.u32 %s115, 1
        %s200 = scalar_lea.sflag [#allocation4], %s199
        %s201 = sand.u32 %s115, 1
        %s202 = smul.addr %s201, 8
        %s203 = scalar_lea.vmem [#allocation3], %s202
        %p204 = scmp.lt.s32.totalorder %s21, 1
        %s205 = scalar_select %p204, %s21, 1
        %s206 = smul.addr %s205, 4
        %s207 = scalar_lea.vmem %s0, %s206
        %p208 = scmp.lt.s32.totalorder %s22, 1
        %s209 = scalar_select %p208, %s22, 1
        %s210 = smul.addr %s209, 16
        %s211 = smul.addr %s210, 4
        %s212 = scalar_lea.vmem %s1, %s211
        %p213 = scmp.lt.s32.totalorder %s22, 1
        %s214 = scalar_select %p213, %s22, 1
        %s215 = smul.addr %s214, 16
        %s216 = smul.addr %s215, 4
        %s217 = scalar_lea.vmem %s2, %s216
        %p219 = scmp.eq.s32.totalorder %s22, 0
        // Predicated region
        $region33: #{tpu_custom_call.1} parent=31 // pred_check
          %p220 = pneg %p219
        $region34: #{tpu_custom_call.1} parent=31 // pred_check_branch
          %222 = sbr.rel (%p220) target = $region36
        $region35: #{tpu_custom_call.1} parent=31 // pred_region
          %vm223 = vcmask 523264
          %224 = vst.msk [vmem:[#allocation2] sm:$0xff] %vm223, 0.0
        $region36: #{tpu_custom_call.1} parent=31 // pred_fallthru
          _
        %v225 = vld [vmem:[%s207] sm:$0xf]
        %v226 = vld [vmem:[%s212] sm:$0xff]
        %v227 = vld [vmem:[%s212 + $0x8] sm:$0xff]
        %v228 = vld [vmem:[%s212 + $0x10] sm:$0xff]
        %v229 = vld [vmem:[%s212 + $0x18] sm:$0xff]
        %v230 = vld [vmem:[%s212 + $0x20] sm:$0xff]
        %v231 = vld [vmem:[%s212 + $0x28] sm:$0xff]
        %v232 = vld [vmem:[%s212 + $0x30] sm:$0xff]
        %v233 = vld [vmem:[%s212 + $0x38] sm:$0xff]
        %v242 = vunpack.c.l.b16 %v226
        %v243 = vunpack.c.h.b16 %v226
        %v244 = vunpack.c.l.b16 %v227
        %v245 = vunpack.c.h.b16 %v227
        %v246 = vunpack.c.l.b16 %v228
        %v247 = vunpack.c.h.b16 %v228
        %v248 = vunpack.c.l.b16 %v229
        %v249 = vunpack.c.h.b16 %v229
        %v250 = vunpack.c.l.b16 %v230
        %v251 = vunpack.c.h.b16 %v230
        %v252 = vunpack.c.l.b16 %v231
        %v253 = vunpack.c.h.b16 %v231
        %v254 = vunpack.c.l.b16 %v232
        %v255 = vunpack.c.h.b16 %v232
        %v256 = vunpack.c.l.b16 %v233
        %v257 = vunpack.c.h.b16 %v233
        %v258 = vpack.c.b16 %v244, %v242
        %v259 = vpack.c.b16 %v245, %v243
        %v260 = vpack.c.b16 %v248, %v246
        %v261 = vpack.c.b16 %v249, %v247
        %v262 = vpack.c.b16 %v252, %v250
        %v263 = vpack.c.b16 %v253, %v251
        %v264 = vpack.c.b16 %v256, %v254
        %v265 = vpack.c.b16 %v257, %v255
        %vm274 = vcmask 523264
        %v276 = vsel %vm274, %v225, 0
        %278 = vmatprep.subr.bf16.mxu0 %v259
        %279 = vmatpush1.bf16.msra.mxu0 %v258
        %280 = vmatprep.subr.bf16.mxu0 %v261
        %281 = vmatpush1.bf16.msra.mxu0 %v260
        %282 = vmatprep.subr.bf16.mxu0 %v263
        %283 = vmatpush1.bf16.msra.mxu0 %v262
        %284 = vmatprep.subr.bf16.mxu0 %v265
        %285 = vmatpush1.bf16.msra.mxu0 %v264
        %286 = vmatprep.subr.bf16.mxu0 0
        %287 = vmatpush1.bf16.msra.mxu0 0
        %288 = vmatprep.subr.bf16.mxu0 0
        %289 = vmatpush1.bf16.msra.mxu0 0
        %290 = vmatprep.subr.bf16.mxu0 0
        %291 = vmatpush1.bf16.msra.mxu0 0
        %292 = vmatprep.subr.bf16.mxu0 0
        %293 = vmatpush1.bf16.msra.mxu0 0
        %294 = vmatprep.subr.bf16.mxu0 0
        %295 = vmatpush1.bf16.msra.mxu0 0
        %296 = vmatprep.subr.bf16.mxu0 0
        %297 = vmatpush1.bf16.msra.mxu0 0
        %298 = vmatprep.subr.bf16.mxu0 0
        %299 = vmatpush1.bf16.msra.mxu0 0
        %300 = vmatprep.subr.bf16.mxu0 0
        %301 = vmatpush1.bf16.msra.mxu0 0
        %302 = vmatprep.subr.bf16.mxu0 0
        %303 = vmatpush1.bf16.msra.mxu0 0
        %304 = vmatprep.subr.bf16.mxu0 0
        %305 = vmatpush1.bf16.msra.mxu0 0
        %306 = vmatprep.subr.bf16.mxu0 0
        %307 = vmatpush1.bf16.msra.mxu0 0
        %308 = vmatprep.subr.bf16.mxu0 0
        %309 = vmatpush1.bf16.msra.mxu0 0
        %310 = vmatprep.mubr.bf16.mxu0 0
        %311 = vmatmul.mubr.bf16.gmra.mrb[0].mxu0 %v276
        %v312 = vpop.f32.mrb[0].mxu0
        %v313 = vadd.f32 0.0, %v312
        %v314 = vpop.f32.mrb[0].mxu0
        %v315 = vadd.f32 0.0, %v314
        %v316 = vpop.f32.mrb[0].mxu0
        %v317 = vpop.f32.mrb[0].mxu0
        %318 = vdwg.mxu0
        %v319 = vxor.u32 %v313, 2147483648
        %v320 = vmul.f32 %v319, 1.442695
        %v321 = vpow.pop %v320
        %v322 = vadd.f32 %v321, 1.0
        %v323 = vrcp.pop %v322
        %v324 = vmul.f32 1.0, %v323
        %v325 = vmul.f32 %v313, %v324
        %v326 = vmul.f32 %v325, %v315
        %v327 = vld [vmem:[#allocation2] sm:$0xff]
        %v328 = vpack.c.bf16 %v326, %v326
        %v329 = vld [vmem:[%s217] sm:$0xf]
        %v330 = vld [vmem:[%s217 + $0x4] sm:$0xf]
        %v331 = vld [vmem:[%s217 + $0x8] sm:$0xf]
        %v332 = vld [vmem:[%s217 + $0xc] sm:$0xf]
        %v333 = vld [vmem:[%s217 + $0x10] sm:$0xf]
        %v334 = vld [vmem:[%s217 + $0x14] sm:$0xf]
        %v335 = vld [vmem:[%s217 + $0x18] sm:$0xf]
        %v336 = vld [vmem:[%s217 + $0x1c] sm:$0xf]
        %v337 = vld [vmem:[%s217 + $0x20] sm:$0xf]
        %v338 = vld [vmem:[%s217 + $0x24] sm:$0xf]
        %v339 = vld [vmem:[%s217 + $0x28] sm:$0xf]
        %v340 = vld [vmem:[%s217 + $0x2c] sm:$0xf]
        %v341 = vld [vmem:[%s217 + $0x30] sm:$0xf]
        %v342 = vld [vmem:[%s217 + $0x34] sm:$0xf]
        %v343 = vld [vmem:[%s217 + $0x38] sm:$0xf]
        %v344 = vld [vmem:[%s217 + $0x3c] sm:$0xf]
        %v361 = vunpack.c.l.b16 %v329
        %v362 = vunpack.c.l.b16 %v330
        %v363 = vunpack.c.l.b16 %v331
        %v364 = vunpack.c.l.b16 %v332
        %v365 = vunpack.c.l.b16 %v333
        %v366 = vunpack.c.l.b16 %v334
        %v367 = vunpack.c.l.b16 %v335
        %v368 = vunpack.c.l.b16 %v336
        %v369 = vunpack.c.l.b16 %v337
        %v370 = vunpack.c.l.b16 %v338
        %v371 = vunpack.c.l.b16 %v339
        %v372 = vunpack.c.l.b16 %v340
        %v373 = vunpack.c.l.b16 %v341
        %v374 = vunpack.c.l.b16 %v342
        %v375 = vunpack.c.l.b16 %v343
        %v376 = vunpack.c.l.b16 %v344
        %v377 = vpack.c.b16 %v362, %v361
        %v378 = vpack.c.b16 %v364, %v363
        %v379 = vpack.c.b16 %v366, %v365
        %v380 = vpack.c.b16 %v368, %v367
        %v381 = vpack.c.b16 %v370, %v369
        %v382 = vpack.c.b16 %v372, %v371
        %v383 = vpack.c.b16 %v374, %v373
        %v384 = vpack.c.b16 %v376, %v375
        %393 = vmatprep.subr.bf16.mxu0 0
        %394 = vmatpush1.bf16.msra.mxu0 %v377
        %395 = vmatprep.subr.bf16.mxu0 0
        %396 = vmatpush1.bf16.msra.mxu0 %v378
        %397 = vmatprep.subr.bf16.mxu0 0
        %398 = vmatpush1.bf16.msra.mxu0 %v379
        %399 = vmatprep.subr.bf16.mxu0 0
        %400 = vmatpush1.bf16.msra.mxu0 %v380
        %401 = vmatprep.subr.bf16.mxu0 0
        %402 = vmatpush1.bf16.msra.mxu0 %v381
        %403 = vmatprep.subr.bf16.mxu0 0
        %404 = vmatpush1.bf16.msra.mxu0 %v382
        %405 = vmatprep.subr.bf16.mxu0 0
        %406 = vmatpush1.bf16.msra.mxu0 %v383
        %407 = vmatprep.subr.bf16.mxu0 0
        %408 = vmatpush1.bf16.msra.mxu0 %v384
        %409 = vmatprep.subr.bf16.mxu0 0
        %410 = vmatpush1.bf16.msra.mxu0 0
        %411 = vmatprep.subr.bf16.mxu0 0
        %412 = vmatpush1.bf16.msra.mxu0 0
        %413 = vmatprep.subr.bf16.mxu0 0
        %414 = vmatpush1.bf16.msra.mxu0 0
        %415 = vmatprep.subr.bf16.mxu0 0
        %416 = vmatpush1.bf16.msra.mxu0 0
        %417 = vmatprep.subr.bf16.mxu0 0
        %418 = vmatpush1.bf16.msra.mxu0 0
        %419 = vmatprep.subr.bf16.mxu0 0
        %420 = vmatpush1.bf16.msra.mxu0 0
        %421 = vmatprep.subr.bf16.mxu0 0
        %422 = vmatpush1.bf16.msra.mxu0 0
        %423 = vmatprep.subr.bf16.mxu0 0
        %424 = vmatpush1.bf16.msra.mxu0 0
        %425 = vmatprep.mubr.bf16.mxu0 0
        %426 = vmatmul.mubr.bf16.gmra.mrb[0].mxu0 %v328
        %v427 = vpop.f32.mrb[0].mxu0
        %v428 = vadd.f32 0.0, %v427
        %v429 = vpop.f32.mrb[0].mxu0
        %v430 = vpop.f32.mrb[0].mxu0
        %v431 = vpop.f32.mrb[0].mxu0
        %432 = vdwg.mxu0
        %v433 = vadd.f32 %v327, %v428
        %434 = vst.msk [vmem:[#allocation2] sm:$0xff] %vm274, %v433
        %p435 = scmp.eq.s32.totalorder %s22, 1
        // Predicated region
        $region37: #{tpu_custom_call.1} parent=31 // pred_check
          %p436 = pneg %p435
        $region38: #{tpu_custom_call.1} parent=31 // pred_check_branch
          %438 = sbr.rel (%p436) target = $region40
        $region39: #{tpu_custom_call.1} parent=31 // pred_region
          %v439 = vld [vmem:[#allocation2] sm:$0xff]
          %440 = vst.msk [vmem:[%s203] sm:$0xff] %vm274, %v439
        $region40: #{tpu_custom_call.1} parent=31 // pred_fallthru
          _
        %s441 = sand.u32 %s115, 1
        %s442 = scalar_lea.sflag [#allocation4], %s441
        %s443 = sand.u32 %s115, 1
        %s444 = smul.addr %s443, 8
        %s445 = scalar_lea.vmem [#allocation3], %s444
        // Predicated region
        $region41: #{tpu_custom_call.1} parent=31 // pred_check
          %p446 = pneg %p125
        $region42: #{tpu_custom_call.1} parent=31 // pred_check_branch
          %448 = sbr.rel (%p446) target = $region44
        $region43: #{tpu_custom_call.1} parent=31 // pred_region
          %s450 = ssub.s32 128, 128
          %451 = vsyncadd %s442, %s450
          %s452 = smul.addr %s21, 128
          %s453 = scalar_lea.hbm %s3, %s452
          %s455 = sshll.u32 %s445, 4
          %s456 = int_to_ptr.vmem [resolvable:$true] %s455
          %458 = dma.vmem_to_hbm [thread:$0]  %s456, 128, %s453, %s442
        $region44: #{tpu_custom_call.1} parent=31 // pred_fallthru
          _
      $region32: #{tpu_custom_call.1} parent=5 // pred_fallthru
        _
      %p459 = scmp.le.s32.totalorder 2, %s12
      // Predicated region
      $region45: #{tpu_custom_call.1} parent=5 // pred_check
        %p460 = pneg %p459
      $region46: #{tpu_custom_call.1} parent=5 // pred_check_branch
        %462 = sbr.rel (%p460) target = $region48
      $region47: #{tpu_custom_call.1} parent=5 // pred_region
        %s463 = ssub.s32 %s12, 2
        // Predicated region
        $region49: #{tpu_custom_call.1} parent=47 // pred_check
          %p464 = pneg %p131
        $region50: #{tpu_custom_call.1} parent=47 // pred_check_branch
          %466 = sbr.rel (%p464) target = $region52
        $region51: #{tpu_custom_call.1} parent=47 // pred_region
          %s467 = sand.u32 %s116, 1
          %s468 = scalar_lea.sflag [#allocation4], %s467
          %s469 = sand.u32 %s116, 1
          %s470 = smul.addr %s469, 8
          %s471 = scalar_lea.vmem [#allocation3], %s470
          %472 = dma.done %s468, 128
        $region52: #{tpu_custom_call.1} parent=47 // pred_fallthru
          _
      $region48: #{tpu_custom_call.1} parent=5 // pred_fallthru
        _
    $region6: #{tpu_custom_call.1} parent=1 // loop_footer
      %s16 = sadd.s32 1, %s12
    $region7: #{tpu_custom_call.1} parent=1 // loop_footer_branch
      %11 = sbr.rel target = $region3
    $region8: #{tpu_custom_call.1} parent=1 // loop_exit
      _
    %473 = vsyncpa [#allocation4], 1
    %s474 = scalar_lea.sflag [#allocation4], 1
    %475 = vsyncpa %s474, 1

</llo_original>
